<compile_context>
chip_gen: v7x
topology: tpu7x:2x2x1
jax: 0.10.0
libtpu: 0.0.40
codegen_flags: <defaults>
</compile_context>

<pallas_src>
import functools

import jax
import jax.numpy as jnp
from jax.experimental import pallas as pl
from jax.experimental.pallas import tpu as pltpu


def mlp_kernel(x_ref, w1_ref, b1_ref, w2_ref, b2_ref, o_ref):
    # lin1: [tn, in_ch] @ [in_ch, hid] on the MXU with bf16 operands, f32 accumulation.
    x_bf = x_ref[...].astype(jnp.bfloat16)
    h = jnp.dot(x_bf, w1_ref[...], preferred_element_type=jnp.float32)
    # Bias add + ReLU stay in f32 on the VPU (v5e has no bf16 VPU).
    h = jnp.maximum(h + b1_ref[...], 0.0)
    # Dropout(p=0.5) is identity at inference time (module eval path).
    # TODO(synk): training-mode dropout would use pltpu.prng_seed + pltpu.prng_random_bits.
    # lin2: [tn, hid] @ [hid, out_ch], bf16 operands, f32 accumulation.
    out = jnp.dot(h.astype(jnp.bfloat16), w2_ref[...], preferred_element_type=jnp.float32)
    o_ref[...] = (out + b2_ref[...]).astype(o_ref.dtype)


def _round_up(x, m):
    return (x + m - 1) // m * m


@functools.partial(jax.jit, static_argnames=("tile_n",))
def baseline_forward(x, w1, b1, w2, b2, *, tile_n=512):
    """x: [N, in_ch] f32; w1: [in_ch, hid] bf16; w2: [hid, out_ch] bf16; biases (1, dim) f32."""
    N, in_ch = x.shape
    in_ch_w, hidden = w1.shape
    hidden_w, out_ch = w2.shape
    assert in_ch_w == in_ch and hidden_w == hidden

    # Row tiling (no HBM padding anywhere):
    #  * small N: split rows into >=2 parallel tiles so both v7x TensorCores get work.
    #  * large N: 512-row tiles (mem-bound sweet spot); partial last tile is masked.
    if N <= tile_n:
        tn = max(_round_up(pl.cdiv(N, 2), 8), 8)
    else:
        tn = tile_n
    grid = (pl.cdiv(N, tn),)

    # Whole-array VMEM residency: weights/biases single-buffered, no per-grid-step DMA.
    resident = pl.BlockSpec(memory_space=pltpu.MemorySpace.VMEM)

    flops = 2 * N * (in_ch * hidden + hidden * out_ch)
    bytes_accessed = (
        x.size * x.dtype.itemsize
        + w1.size * w1.dtype.itemsize
        + w2.size * w2.dtype.itemsize
        + b1.size * b1.dtype.itemsize
        + b2.size * b2.dtype.itemsize
        + N * out_ch * 4
    )

    return pl.pallas_call(
        mlp_kernel,
        out_shape=jax.ShapeDtypeStruct((N, out_ch), jnp.float32),
        grid_spec=pl.GridSpec(
            grid=grid,
            in_specs=[
                pl.BlockSpec((tn, in_ch), lambda i: (i, 0)),  # x row tile (pipelined)
                resident,  # W1 (bf16)
                resident,  # b1 (f32)
                resident,  # W2 (bf16)
                resident,  # b2 (f32)
            ],
            out_specs=pl.BlockSpec((tn, out_ch), lambda i: (i, 0)),
        ),
        compiler_params=pltpu.CompilerParams(
            dimension_semantics=("parallel",),
        ),
        cost_estimate=pl.CostEstimate(
            flops=flops, transcendentals=0, bytes_accessed=bytes_accessed
        ),
    )(x, w1, b1, w2, b2)


def init_linear_params(key, fan_in, fan_out):
    # Mirrors torch.nn.Linear default init: U(-1/sqrt(fan_in), 1/sqrt(fan_in))
    kw, kb = jax.random.split(key)
    bound = 1.0 / jnp.sqrt(jnp.float32(fan_in))
    w = jax.random.uniform(kw, (fan_in, fan_out), jnp.float32, -bound, bound)
    b = jax.random.uniform(kb, (1, fan_out), jnp.float32, -bound, bound)
    return w, b


def _reference(x, w1, b1, w2, b2):
    return jnp.maximum(x @ w1 + b1, 0.0) @ w2 + b2


if __name__ == "__main__":
    key = jax.random.PRNGKey(0)
    k_x, k_l1, k_l2, k_big = jax.random.split(key, 4)

    # Small shapes consistent with the module: x is [N, in_channels], hidden_channels=128.
    N, in_channels, hidden_channels, out_channels = 16, 32, 128, 16

    x = jax.random.normal(k_x, (N, in_channels), jnp.float32)
    w1, b1 = init_linear_params(k_l1, in_channels, hidden_channels)
    w2, b2 = init_linear_params(k_l2, hidden_channels, out_channels)

    # Pre-cast the MXU operands to bf16 once, outside the hot path (biases stay f32).
    w1_bf = w1.astype(jnp.bfloat16)
    w2_bf = w2.astype(jnp.bfloat16)

    out = jax.block_until_ready(baseline_forward(x, w1_bf, b1, w2_bf, b2))
    ref = _reference(x, w1, b1, w2, b2)
    assert out.shape == (N, out_channels)
    # bf16 matmul operands vs f32 reference -> loosened tolerance.
    assert jnp.allclose(out, ref, atol=5e-2, rtol=5e-2)

    # Multi-grid-step path: N=1000, tile_n=512 -> grid=(2,), partial last row tile (masked).
    N_big = 1000
    x_big = jax.random.normal(k_big, (N_big, in_channels), jnp.float32)
    out_big = jax.block_until_ready(
        baseline_forward(x_big, w1_bf, b1, w2_bf, b2, tile_n=512)
    )
    ref_big = _reference(x_big, w1, b1, w2, b2)
    assert out_big.shape == (N_big, out_channels)
    assert jnp.allclose(out_big, ref_big, atol=5e-2, rtol=5e-2)

    print("KERNEL_OK")
</pallas_src>

<mosaic_0001>
module attributes {stable_mosaic.version = 11 : i64} {
  func.func @mlp_kernel(%arg0: i32, %arg1: memref<8x32xf32, #tpu.memory_space<vmem>>, %arg2: memref<32x128xbf16, #tpu.memory_space<vmem>>, %arg3: memref<1x128xf32, #tpu.memory_space<vmem>>, %arg4: memref<128x16xbf16, #tpu.memory_space<vmem>>, %arg5: memref<1x16xf32, #tpu.memory_space<vmem>>, %arg6: memref<8x16xf32, #tpu.memory_space<vmem>>) attributes {dimension_semantics = [#tpu.dimension_semantics<parallel>], iteration_bounds = array<i64: 2>, scalar_prefetch = 0 : i64, scratch_operands = 0 : i64, tpu.core_type = #tpu.core_type<tc>, window_params = [{transform_indices = @transform_0, window_bounds = array<i64: 8, 32>}, {pipeline_mode = #tpu.pipeline_mode<synchronous>, transform_indices = @transform_1, window_bounds = array<i64: 32, 128>}, {pipeline_mode = #tpu.pipeline_mode<synchronous>, transform_indices = @transform_2, window_bounds = array<i64: 1, 128>}, {pipeline_mode = #tpu.pipeline_mode<synchronous>, transform_indices = @transform_3, window_bounds = array<i64: 128, 16>}, {pipeline_mode = #tpu.pipeline_mode<synchronous>, transform_indices = @transform_4, window_bounds = array<i64: 1, 16>}, {transform_indices = @transform_5, window_bounds = array<i64: 8, 16>}]} {
    %c0 = arith.constant 0 : index
    %c0_0 = arith.constant 0 : index
    %0 = vector.load %arg1[%c0, %c0_0] : memref<8x32xf32, #tpu.memory_space<vmem>>, vector<8x32xf32>
    %1 = arith.truncf %0 : vector<8x32xf32> to vector<8x32xbf16>
    %c0_1 = arith.constant 0 : index
    %c0_2 = arith.constant 0 : index
    %2 = vector.load %arg2[%c0_1, %c0_2] : memref<32x128xbf16, #tpu.memory_space<vmem>>, vector<32x128xbf16>
    %cst = arith.constant dense<0.000000e+00> : vector<8x128xf32>
    %3 = tpu.matmul %1, %2, %cst {dimension_numbers = #tpu.dot_dimension_numbers<[1], [0], [0], [1], [0, 0, 1, 1], [], []>} : vector<8x32xbf16>, vector<32x128xbf16>, vector<8x128xf32> -> vector<8x128xf32>
    %c0_3 = arith.constant 0 : index
    %c0_4 = arith.constant 0 : index
    %4 = vector.load %arg3[%c0_3, %c0_4] : memref<1x128xf32, #tpu.memory_space<vmem>>, vector<1x128xf32>
    %5 = vector.broadcast %4 : vector<1x128xf32> to vector<8x128xf32>
    %6 = arith.addf %3, %5 : vector<8x128xf32>
    %cst_5 = arith.constant 0.000000e+00 : f32
    %7 = vector.broadcast %cst_5 : f32 to vector<8x128xf32>
    %8 = arith.maximumf %6, %7 : vector<8x128xf32>
    %9 = arith.truncf %8 : vector<8x128xf32> to vector<8x128xbf16>
    %c0_6 = arith.constant 0 : index
    %c0_7 = arith.constant 0 : index
    %10 = vector.load %arg4[%c0_6, %c0_7] : memref<128x16xbf16, #tpu.memory_space<vmem>>, vector<128x16xbf16>
    %cst_8 = arith.constant dense<0.000000e+00> : vector<8x16xf32>
    %11 = tpu.matmul %9, %10, %cst_8 {dimension_numbers = #tpu.dot_dimension_numbers<[1], [0], [0], [1], [0, 0, 1, 1], [], []>} : vector<8x128xbf16>, vector<128x16xbf16>, vector<8x16xf32> -> vector<8x16xf32>
    %c0_9 = arith.constant 0 : index
    %c0_10 = arith.constant 0 : index
    %12 = vector.load %arg5[%c0_9, %c0_10] : memref<1x16xf32, #tpu.memory_space<vmem>>, vector<1x16xf32>
    %13 = vector.broadcast %12 : vector<1x16xf32> to vector<8x16xf32>
    %14 = arith.addf %11, %13 : vector<8x16xf32>
    %c0_11 = arith.constant 0 : index
    %c0_12 = arith.constant 0 : index
    %15 = vector.load %arg6[%c0_11, %c0_12] : memref<8x16xf32, #tpu.memory_space<vmem>>, vector<8x16xf32>
    tpu.vector_store %arg6[%c0_11, %c0_12], %14 {strides = array<i32>} : memref<8x16xf32, #tpu.memory_space<vmem>>, vector<8x16xf32>,
    return
  }
  func.func @transform_0(%arg0: i32) -> (i32, i32) {
    %c0_i32 = arith.constant 0 : i32
    %c0_i32_0 = arith.constant 0 : i32
    return %arg0, %c0_i32 : i32, i32
  }
  func.func @transform_1(%arg0: i32) -> (i32, i32) {
    %c0_i32 = arith.constant 0 : i32
    %c0_i32_0 = arith.constant 0 : i32
    %c0_i32_1 = arith.constant 0 : i32
    return %c0_i32, %c0_i32_0 : i32, i32
  }
  func.func @transform_2(%arg0: i32) -> (i32, i32) {
    %c0_i32 = arith.constant 0 : i32
    %c0_i32_0 = arith.constant 0 : i32
    %c0_i32_1 = arith.constant 0 : i32
    return %c0_i32, %c0_i32_0 : i32, i32
  }
  func.func @transform_3(%arg0: i32) -> (i32, i32) {
    %c0_i32 = arith.constant 0 : i32
    %c0_i32_0 = arith.constant 0 : i32
    %c0_i32_1 = arith.constant 0 : i32
    return %c0_i32, %c0_i32_0 : i32, i32
  }
  func.func @transform_4(%arg0: i32) -> (i32, i32) {
    %c0_i32 = arith.constant 0 : i32
    %c0_i32_0 = arith.constant 0 : i32
    %c0_i32_1 = arith.constant 0 : i32
    return %c0_i32, %c0_i32_0 : i32, i32
  }
  func.func @transform_5(%arg0: i32) -> (i32, i32) {
    %c0_i32 = arith.constant 0 : i32
    %c0_i32_0 = arith.constant 0 : i32
    return %arg0, %c0_i32 : i32, i32
  }
}

</mosaic_0001>

<llo_original>
// kernel: baseline_forward.1
$region0: #{baseline_forward.1}
  #allocation0 [shape = 'u32[]', space=smem, size = 0x4, offset = 0x4, fixed_abs, tag = 'smem constant byte address 0x4 - core index']
  #allocation1 [shape = 'u32[144,128]{1,0:T(1,128)}', space=vmem, size = 0x12000, scoped, tag = 'internal scratch']
  %s0 = inlined_call_operand.vmem [shape: f32[16,32], index: 0, kind: input, shape index: {}]
  %s1 = inlined_call_operand.vmem [shape: bf16[32,128], index: 1, kind: input, shape index: {}]
  %s2 = inlined_call_operand.vmem [shape: f32[1,128], index: 2, kind: input, shape index: {}]
  %s3 = inlined_call_operand.vmem [shape: bf16[128,16], index: 3, kind: input, shape index: {}]
  %s4 = inlined_call_operand.vmem [shape: f32[1,16], index: 4, kind: input, shape index: {}]
  %s5 = inlined_call_operand.hbm [shape: f32[16,16], index: 5, kind: output, shape index: {}]
  %s6 = sld [smem:[#allocation0]]
  $region53: #{baseline_forward.1} parent=0
    _
  %s8 = ssub.s32 1, %s6
  %s9 = scalar_select 0, %s8, %s6
  $region1: #{baseline_forward.1} parent=0
    #allocation2 [shape = 'u8[8192]{0}', space=vmem, size = 0x2000, scoped, tag = 'output window, operand 0']
    #allocation3 [shape = 's32[2]{0}', space=sflag, size = 0x8, scoped, tag = 'scoped memory for baseline_forward.1']
    %10 = vsyncpa [#allocation3], 0
    %s11 = scalar_lea.sflag [#allocation3], 1
    %12 = vsyncpa %s11, 0
    loop: start=0, step=1, limit=4
    $region2: #{baseline_forward.1} parent=1 // loop_pre_header
      _
    $region3: #{baseline_forward.1} parent=1 // loop_header
      %s14 = sphi 0, %s18
      %p15 = scmp.ge.s32.totalorder %s14, 4
      %s24 = sphi 0, %s26
      %s27 = sphi 0, %s24
      %s28 = sphi 0, %s27
      %s44 = sphi 0, %s28
      %s48 = sphi 0, %s48
      %s50 = sphi 0, %s48
      %s51 = sphi 0, %s50
      %s65 = sphi 0, %s51
      %s69 = sphi 0, %s69
      %s71 = sphi 0, %s69
      %s72 = sphi 0, %s71
      %s86 = sphi 0, %s72
      %s90 = sphi 0, %s90
      %s92 = sphi 0, %s90
      %s93 = sphi 0, %s92
      %s107 = sphi 0, %s93
      %s111 = sphi 0, %s111
      %s113 = sphi 0, %s111
      %s114 = sphi 0, %s113
      %s128 = sphi 0, %s114
      %s134 = sphi 0, %s136
      %s137 = sphi 0, %s134
      %s138 = sphi 0, %s137
      %s154 = sphi 0, %s138
    $region4: #{baseline_forward.1} parent=1 // loop_header_branch
      %17 = sbr.rel (%p15) target = $region8
    $region5: #{baseline_forward.1} parent=1 // loop_body
      %s19 = ssub.s32 %s14, 1
      %s20 = ssub.s32 %s14, 2
      %s21 = sadd.s32 %s14, 1
      %s22 = ssub.s32 %s14, %s21
      %p23 = scmp.eq.s32.totalorder %s22, 0
      %s25 = sadd.s32 %s24, 1
      %s26 = scalar_select %p23, %s24, %s25
      %p29 = pneg %p23
      %p30 = scmp.eq.s32.totalorder %s14, 1
      %p31 = por %p29, %p30
      %p32 = scmp.ne.s32.totalorder %s24, %s27
      %p33 = scmp.eq.s32.totalorder %s14, 0
      %p34 = por %p32, %p33
      %p35 = scmp.ne.s32.totalorder %s24, %s27
      %p36 = scmp.eq.s32.totalorder %s19, 1
      %p37 = por %p35, %p36
      %p38 = scmp.ne.s32.totalorder %s27, %s28
      %p39 = scmp.eq.s32.totalorder %s19, 0
      %p40 = por %p38, %p39
      %p41 = scmp.ne.s32.totalorder %s27, %s28
      %p42 = scmp.eq.s32.totalorder %s20, 1
      %p43 = por %p41, %p42
      %p45 = scmp.ne.s32.totalorder %s28, %s44
      %p46 = scmp.eq.s32.totalorder %s20, 0
      %p47 = por %p45, %p46
      %s49 = sadd.s32 %s48, 1
      %p52 = scmp.eq.s32.totalorder %s14, 1
      %p53 = scmp.ne.s32.totalorder %s48, %s50
      %p54 = scmp.eq.s32.totalorder %s14, 0
      %p55 = por %p53, %p54
      %p56 = scmp.ne.s32.totalorder %s48, %s50
      %p57 = scmp.eq.s32.totalorder %s19, 1
      %p58 = por %p56, %p57
      %p59 = scmp.ne.s32.totalorder %s50, %s51
      %p60 = scmp.eq.s32.totalorder %s19, 0
      %p61 = por %p59, %p60
      %p62 = scmp.ne.s32.totalorder %s50, %s51
      %p63 = scmp.eq.s32.totalorder %s20, 1
      %p64 = por %p62, %p63
      %p66 = scmp.ne.s32.totalorder %s51, %s65
      %p67 = scmp.eq.s32.totalorder %s20, 0
      %p68 = por %p66, %p67
      %s70 = sadd.s32 %s69, 1
      %p73 = scmp.eq.s32.totalorder %s14, 1
      %p74 = scmp.ne.s32.totalorder %s69, %s71
      %p75 = scmp.eq.s32.totalorder %s14, 0
      %p76 = por %p74, %p75
      %p77 = scmp.ne.s32.totalorder %s69, %s71
      %p78 = scmp.eq.s32.totalorder %s19, 1
      %p79 = por %p77, %p78
      %p80 = scmp.ne.s32.totalorder %s71, %s72
      %p81 = scmp.eq.s32.totalorder %s19, 0
      %p82 = por %p80, %p81
      %p83 = scmp.ne.s32.totalorder %s71, %s72
      %p84 = scmp.eq.s32.totalorder %s20, 1
      %p85 = por %p83, %p84
      %p87 = scmp.ne.s32.totalorder %s72, %s86
      %p88 = scmp.eq.s32.totalorder %s20, 0
      %p89 = por %p87, %p88
      %s91 = sadd.s32 %s90, 1
      %p94 = scmp.eq.s32.totalorder %s14, 1
      %p95 = scmp.ne.s32.totalorder %s90, %s92
      %p96 = scmp.eq.s32.totalorder %s14, 0
      %p97 = por %p95, %p96
      %p98 = scmp.ne.s32.totalorder %s90, %s92
      %p99 = scmp.eq.s32.totalorder %s19, 1
      %p100 = por %p98, %p99
      %p101 = scmp.ne.s32.totalorder %s92, %s93
      %p102 = scmp.eq.s32.totalorder %s19, 0
      %p103 = por %p101, %p102
      %p104 = scmp.ne.s32.totalorder %s92, %s93
      %p105 = scmp.eq.s32.totalorder %s20, 1
      %p106 = por %p104, %p105
      %p108 = scmp.ne.s32.totalorder %s93, %s107
      %p109 = scmp.eq.s32.totalorder %s20, 0
      %p110 = por %p108, %p109
      %s112 = sadd.s32 %s111, 1
      %p115 = scmp.eq.s32.totalorder %s14, 1
      %p116 = scmp.ne.s32.totalorder %s111, %s113
      %p117 = scmp.eq.s32.totalorder %s14, 0
      %p118 = por %p116, %p117
      %p119 = scmp.ne.s32.totalorder %s111, %s113
      %p120 = scmp.eq.s32.totalorder %s19, 1
      %p121 = por %p119, %p120
      %p122 = scmp.ne.s32.totalorder %s113, %s114
      %p123 = scmp.eq.s32.totalorder %s19, 0
      %p124 = por %p122, %p123
      %p125 = scmp.ne.s32.totalorder %s113, %s114
      %p126 = scmp.eq.s32.totalorder %s20, 1
      %p127 = por %p125, %p126
      %p129 = scmp.ne.s32.totalorder %s114, %s128
      %p130 = scmp.eq.s32.totalorder %s20, 0
      %p131 = por %p129, %p130
      %s132 = ssub.s32 %s14, %s21
      %p133 = scmp.eq.s32.totalorder %s132, 0
      %s135 = sadd.s32 %s134, 1
      %s136 = scalar_select %p133, %s134, %s135
      %p139 = pneg %p133
      %p140 = scmp.eq.s32.totalorder %s14, 1
      %p141 = por %p139, %p140
      %p142 = scmp.ne.s32.totalorder %s134, %s137
      %p143 = scmp.eq.s32.totalorder %s14, 0
      %p144 = por %p142, %p143
      %p145 = scmp.ne.s32.totalorder %s134, %s137
      %p146 = scmp.eq.s32.totalorder %s19, 1
      %p147 = por %p145, %p146
      %p148 = scmp.ne.s32.totalorder %s137, %s138
      %p149 = scmp.eq.s32.totalorder %s19, 0
      %p150 = por %p148, %p149
      %p151 = scmp.ne.s32.totalorder %s137, %s138
      %p152 = scmp.eq.s32.totalorder %s20, 1
      %p153 = por %p151, %p152
      %p155 = scmp.ne.s32.totalorder %s138, %s154
      %p156 = scmp.eq.s32.totalorder %s20, 0
      %p157 = por %p155, %p156
      %p158 = scmp.le.s32.totalorder 1, %s14
      %p159 = scmp.lt.s32.totalorder %s14, 3
      %p160 = pnand %p158, %p159
      %p161 = pneg %p160
      // Predicated region
      $region9: #{baseline_forward.1} parent=5 // pred_check
        _
      $region10: #{baseline_forward.1} parent=5 // pred_check_branch
        %163 = sbr.rel (%p160) target = $region12
      $region11: #{baseline_forward.1} parent=5 // pred_region
        %s164 = ssub.s32 %s14, 1
        // Predicated region
        $region13: #{baseline_forward.1} parent=11 // pred_check
          %p165 = pneg %p61
        $region14: #{baseline_forward.1} parent=11 // pred_check_branch
          %167 = sbr.rel (%p165) target = $region16
        $region15: #{baseline_forward.1} parent=11 // pred_region
          _
        $region16: #{baseline_forward.1} parent=11 // pred_fallthru
          _
        // Predicated region
        $region17: #{baseline_forward.1} parent=11 // pred_check
          %p168 = pneg %p82
        $region18: #{baseline_forward.1} parent=11 // pred_check_branch
          %170 = sbr.rel (%p168) target = $region20
        $region19: #{baseline_forward.1} parent=11 // pred_region
          _
        $region20: #{baseline_forward.1} parent=11 // pred_fallthru
          _
        // Predicated region
        $region21: #{baseline_forward.1} parent=11 // pred_check
          %p171 = pneg %p103
        $region22: #{baseline_forward.1} parent=11 // pred_check_branch
          %173 = sbr.rel (%p171) target = $region24
        $region23: #{baseline_forward.1} parent=11 // pred_region
          _
        $region24: #{baseline_forward.1} parent=11 // pred_fallthru
          _
        // Predicated region
        $region25: #{baseline_forward.1} parent=11 // pred_check
          %p174 = pneg %p124
        $region26: #{baseline_forward.1} parent=11 // pred_check_branch
          %176 = sbr.rel (%p174) target = $region28
        $region27: #{baseline_forward.1} parent=11 // pred_region
          _
        $region28: #{baseline_forward.1} parent=11 // pred_fallthru
          _
      $region12: #{baseline_forward.1} parent=5 // pred_fallthru
        _
      %p177 = scmp.lt.s32.totalorder %s14, 2
      // Predicated region
      $region29: #{baseline_forward.1} parent=5 // pred_check
        %p178 = pneg %p177
      $region30: #{baseline_forward.1} parent=5 // pred_check_branch
        %180 = sbr.rel (%p178) target = $region32
      $region31: #{baseline_forward.1} parent=5 // pred_region
        // Predicated region
        $region33: #{baseline_forward.1} parent=31 // pred_check
          %p181 = pneg %p34
        $region34: #{baseline_forward.1} parent=31 // pred_check_branch
          %183 = sbr.rel (%p181) target = $region36
        $region35: #{baseline_forward.1} parent=31 // pred_region
          %p184 = scmp.lt.s32.totalorder %s14, 1
          %s185 = scalar_select %p184, %s14, 1
          %s186 = smul.addr %s185, 8
          %s187 = scalar_lea.vmem %s0, %s186
        $region36: #{baseline_forward.1} parent=31 // pred_fallthru
          _
      $region32: #{baseline_forward.1} parent=5 // pred_fallthru
        _
      %p188 = scmp.le.s32.totalorder 1, %s14
      %p189 = scmp.lt.s32.totalorder %s14, 3
      %p190 = pnand %p188, %p189
      %p191 = pneg %p190
      // Predicated region
      $region37: #{baseline_forward.1} parent=5 // pred_check
        _
      $region38: #{baseline_forward.1} parent=5 // pred_check_branch
        %193 = sbr.rel (%p190) target = $region40
      $region39: #{baseline_forward.1} parent=5 // pred_region
        %s194 = ssub.s32 %s14, 1
        %p195 = scmp.lt.s32.totalorder %s19, 1
        %s196 = scalar_select %p195, %s19, 1
        %s197 = smul.addr %s196, 8
        %s198 = scalar_lea.vmem %s0, %s197
        %p199 = pneg %p40
        %p200 = pneg %p37
        %p201 = pneg %p61
        %p202 = pneg %p58
        %p203 = pneg %p82
        %p204 = pneg %p79
        %p205 = pneg %p103
        %p206 = pneg %p100
        %p207 = pneg %p124
        %p208 = pneg %p121
        %p209 = pneg %p150
        %p210 = pneg %p147
        %s211 = sand.u32 %s137, 1
        %s212 = scalar_lea.sflag [#allocation3], %s211
        %s213 = sand.u32 %s137, 1
        %s214 = smul.addr %s213, 8
        %s215 = scalar_lea.vmem [#allocation2], %s214
        %p216 = scmp.lt.s32.totalorder %s19, 1
        %s217 = scalar_select %p216, %s19, 1
        %s218 = smul.addr %s217, 8
        %s219 = scalar_lea.vmem %s0, %s218
        %v221 = vld [vmem:[%s219] sm:$0xff]
        %v222 = vpack.c.bf16 %v221, %v221
        %v223 = vld [vmem:[%s1] sm:$0xf]
        %v224 = vld [vmem:[%s1 + $0x4] sm:$0xf]
        %v225 = vld [vmem:[%s1 + $0x8] sm:$0xf]
        %v226 = vld [vmem:[%s1 + $0xc] sm:$0xf]
        %v227 = vld [vmem:[%s2] sm:$0x1]
        %v229 = vlaneseq
        %v230 = vshrl.u32 %v229, 7
        %v231 = vsub.s32 0, %v230
        %v232 = vrot.slane %v227, %v231
        %v238 = vunpack.c.l.b16 %v223
        %v239 = vunpack.c.l.b16 %v224
        %v240 = vunpack.c.l.b16 %v225
        %v241 = vunpack.c.l.b16 %v226
        %v242 = vpack.c.b16 %v239, %v238
        %v243 = vpack.c.b16 %v241, %v240
        %vm246 = vcmask 261120
        %v248 = vsel %vm246, %v222, 0
        %250 = vmatprep.subr.bf16.mxu0 0
        %251 = vmatpush1.bf16.msra.mxu0 %v242
        %252 = vmatprep.subr.bf16.mxu0 0
        %253 = vmatpush1.bf16.msra.mxu0 %v243
        %254 = vmatprep.subr.bf16.mxu0 0
        %255 = vmatpush1.bf16.msra.mxu0 0
        %256 = vmatprep.subr.bf16.mxu0 0
        %257 = vmatpush1.bf16.msra.mxu0 0
        %258 = vmatprep.subr.bf16.mxu0 0
        %259 = vmatpush1.bf16.msra.mxu0 0
        %260 = vmatprep.subr.bf16.mxu0 0
        %261 = vmatpush1.bf16.msra.mxu0 0
        %262 = vmatprep.subr.bf16.mxu0 0
        %263 = vmatpush1.bf16.msra.mxu0 0
        %264 = vmatprep.subr.bf16.mxu0 0
        %265 = vmatpush1.bf16.msra.mxu0 0
        %266 = vmatprep.subr.bf16.mxu0 0
        %267 = vmatpush1.bf16.msra.mxu0 0
        %268 = vmatprep.subr.bf16.mxu0 0
        %269 = vmatpush1.bf16.msra.mxu0 0
        %270 = vmatprep.subr.bf16.mxu0 0
        %271 = vmatpush1.bf16.msra.mxu0 0
        %272 = vmatprep.subr.bf16.mxu0 0
        %273 = vmatpush1.bf16.msra.mxu0 0
        %274 = vmatprep.subr.bf16.mxu0 0
        %275 = vmatpush1.bf16.msra.mxu0 0
        %276 = vmatprep.subr.bf16.mxu0 0
        %277 = vmatpush1.bf16.msra.mxu0 0
        %278 = vmatprep.subr.bf16.mxu0 0
        %279 = vmatpush1.bf16.msra.mxu0 0
        %280 = vmatprep.subr.bf16.mxu0 0
        %281 = vmatpush1.bf16.msra.mxu0 0
        %282 = vmatprep.mubr.bf16.mxu0 0
        %283 = vmatmul.mubr.bf16.gmra.mrb[0].mxu0 %v248
        %v284 = vpop.f32.mrb[0].mxu0
        %v285 = vadd.f32 %v232, %v284
        %v286 = vpop.f32.mrb[0].mxu0
        %v287 = vpop.f32.mrb[0].mxu0
        %v288 = vpop.f32.mrb[0].mxu0
        %289 = vdwg.mxu0
        %v290 = vmax.f32 %v285, 0.0
        %v291 = vpack.c.bf16 %v290, %v290
        %v292 = vld [vmem:[%s3] sm:$0xf]
        %v293 = vld [vmem:[%s3 + $0x4] sm:$0xf]
        %v294 = vld [vmem:[%s3 + $0x8] sm:$0xf]
        %v295 = vld [vmem:[%s3 + $0xc] sm:$0xf]
        %v296 = vld [vmem:[%s3 + $0x10] sm:$0xf]
        %v297 = vld [vmem:[%s3 + $0x14] sm:$0xf]
        %v298 = vld [vmem:[%s3 + $0x18] sm:$0xf]
        %v299 = vld [vmem:[%s3 + $0x1c] sm:$0xf]
        %v300 = vld [vmem:[%s3 + $0x20] sm:$0xf]
        %v301 = vld [vmem:[%s3 + $0x24] sm:$0xf]
        %v302 = vld [vmem:[%s3 + $0x28] sm:$0xf]
        %v303 = vld [vmem:[%s3 + $0x2c] sm:$0xf]
        %v304 = vld [vmem:[%s3 + $0x30] sm:$0xf]
        %v305 = vld [vmem:[%s3 + $0x34] sm:$0xf]
        %v306 = vld [vmem:[%s3 + $0x38] sm:$0xf]
        %v307 = vld [vmem:[%s3 + $0x3c] sm:$0xf]
        %v308 = vld [vmem:[%s4] sm:$0x1]
        %v310 = vlaneseq
        %v311 = vshrl.u32 %v310, 7
        %v312 = vsub.s32 0, %v311
        %v313 = vrot.slane %v308, %v312
        %v331 = vunpack.c.l.b16 %v292
        %v332 = vunpack.c.l.b16 %v293
        %v333 = vunpack.c.l.b16 %v294
        %v334 = vunpack.c.l.b16 %v295
        %v335 = vunpack.c.l.b16 %v296
        %v336 = vunpack.c.l.b16 %v297
        %v337 = vunpack.c.l.b16 %v298
        %v338 = vunpack.c.l.b16 %v299
        %v339 = vunpack.c.l.b16 %v300
        %v340 = vunpack.c.l.b16 %v301
        %v341 = vunpack.c.l.b16 %v302
        %v342 = vunpack.c.l.b16 %v303
        %v343 = vunpack.c.l.b16 %v304
        %v344 = vunpack.c.l.b16 %v305
        %v345 = vunpack.c.l.b16 %v306
        %v346 = vunpack.c.l.b16 %v307
        %v347 = vpack.c.b16 %v332, %v331
        %v348 = vpack.c.b16 %v334, %v333
        %v349 = vpack.c.b16 %v336, %v335
        %v350 = vpack.c.b16 %v338, %v337
        %v351 = vpack.c.b16 %v340, %v339
        %v352 = vpack.c.b16 %v342, %v341
        %v353 = vpack.c.b16 %v344, %v343
        %v354 = vpack.c.b16 %v346, %v345
        %363 = vmatprep.subr.bf16.mxu0 0
        %364 = vmatpush1.bf16.msra.mxu0 %v347
        %365 = vmatprep.subr.bf16.mxu0 0
        %366 = vmatpush1.bf16.msra.mxu0 %v348
        %367 = vmatprep.subr.bf16.mxu0 0
        %368 = vmatpush1.bf16.msra.mxu0 %v349
        %369 = vmatprep.subr.bf16.mxu0 0
        %370 = vmatpush1.bf16.msra.mxu0 %v350
        %371 = vmatprep.subr.bf16.mxu0 0
        %372 = vmatpush1.bf16.msra.mxu0 %v351
        %373 = vmatprep.subr.bf16.mxu0 0
        %374 = vmatpush1.bf16.msra.mxu0 %v352
        %375 = vmatprep.subr.bf16.mxu0 0
        %376 = vmatpush1.bf16.msra.mxu0 %v353
        %377 = vmatprep.subr.bf16.mxu0 0
        %378 = vmatpush1.bf16.msra.mxu0 %v354
        %379 = vmatprep.subr.bf16.mxu0 0
        %380 = vmatpush1.bf16.msra.mxu0 0
        %381 = vmatprep.subr.bf16.mxu0 0
        %382 = vmatpush1.bf16.msra.mxu0 0
        %383 = vmatprep.subr.bf16.mxu0 0
        %384 = vmatpush1.bf16.msra.mxu0 0
        %385 = vmatprep.subr.bf16.mxu0 0
        %386 = vmatpush1.bf16.msra.mxu0 0
        %387 = vmatprep.subr.bf16.mxu0 0
        %388 = vmatpush1.bf16.msra.mxu0 0
        %389 = vmatprep.subr.bf16.mxu0 0
        %390 = vmatpush1.bf16.msra.mxu0 0
        %391 = vmatprep.subr.bf16.mxu0 0
        %392 = vmatpush1.bf16.msra.mxu0 0
        %393 = vmatprep.subr.bf16.mxu0 0
        %394 = vmatpush1.bf16.msra.mxu0 0
        %395 = vmatprep.mubr.bf16.mxu0 0
        %396 = vmatmul.mubr.bf16.gmra.mrb[0].mxu0 %v291
        %v397 = vpop.f32.mrb[0].mxu0
        %v398 = vadd.f32 %v313, %v397
        %v399 = vpop.f32.mrb[0].mxu0
        %v400 = vpop.f32.mrb[0].mxu0
        %v401 = vpop.f32.mrb[0].mxu0
        %402 = vdwg.mxu0
        %vm403 = vcmask 130048
        %404 = vst.msk [vmem:[%s215] sm:$0xff] %vm403, %v398
        %s405 = sand.u32 %s137, 1
        %s406 = scalar_lea.sflag [#allocation3], %s405
        %s407 = sand.u32 %s137, 1
        %s408 = smul.addr %s407, 8
        %s409 = scalar_lea.vmem [#allocation2], %s408
        // Predicated region
        $region41: #{baseline_forward.1} parent=39 // pred_check
          %p410 = pneg %p147
        $region42: #{baseline_forward.1} parent=39 // pred_check_branch
          %412 = sbr.rel (%p410) target = $region44
        $region43: #{baseline_forward.1} parent=39 // pred_region
          %s414 = ssub.s32 128, 128
          %415 = vsyncadd %s406, %s414
          %s416 = smul.addr %s19, 128
          %s417 = scalar_lea.hbm %s5, %s416
          %s419 = sshll.u32 %s409, 4
          %s420 = int_to_ptr.vmem [resolvable:$true] %s419
          %422 = dma.vmem_to_hbm [thread:$0]  %s420, 128, %s417, %s406
        $region44: #{baseline_forward.1} parent=39 // pred_fallthru
          _
      $region40: #{baseline_forward.1} parent=5 // pred_fallthru
        _
      %p423 = scmp.le.s32.totalorder 2, %s14
      // Predicated region
      $region45: #{baseline_forward.1} parent=5 // pred_check
        %p424 = pneg %p423
      $region46: #{baseline_forward.1} parent=5 // pred_check_branch
        %426 = sbr.rel (%p424) target = $region48
      $region47: #{baseline_forward.1} parent=5 // pred_region
        %s427 = ssub.s32 %s14, 2
        // Predicated region
        $region49: #{baseline_forward.1} parent=47 // pred_check
          %p428 = pneg %p153
        $region50: #{baseline_forward.1} parent=47 // pred_check_branch
          %430 = sbr.rel (%p428) target = $region52
        $region51: #{baseline_forward.1} parent=47 // pred_region
          %s431 = sand.u32 %s138, 1
          %s432 = scalar_lea.sflag [#allocation3], %s431
          %s433 = sand.u32 %s138, 1
          %s434 = smul.addr %s433, 8
          %s435 = scalar_lea.vmem [#allocation2], %s434
          %436 = dma.done %s432, 128
        $region52: #{baseline_forward.1} parent=47 // pred_fallthru
          _
      $region48: #{baseline_forward.1} parent=5 // pred_fallthru
        _
    $region6: #{baseline_forward.1} parent=1 // loop_footer
      %s18 = sadd.s32 1, %s14
    $region7: #{baseline_forward.1} parent=1 // loop_footer_branch
      %13 = sbr.rel target = $region3
    $region8: #{baseline_forward.1} parent=1 // loop_exit
      _
    %437 = vsyncpa [#allocation3], 1
    %s438 = scalar_lea.sflag [#allocation3], 1
    %439 = vsyncpa %s438, 1

</llo_original>
